<compile_context>
chip_gen: v6e
topology: v6e:2x2x1
jax: 0.10.0
libtpu: 0.0.40
codegen_flags: <defaults>
</compile_context>

<pallas_src>
import functools

import jax
import jax.numpy as jnp
from jax.experimental import pallas as pl
from jax.experimental.pallas import tpu as pltpu


def _round_up(v, m):
    return (v + m - 1) // m * m


def _pad_axis(a, axis, target):
    pad = target - a.shape[axis]
    if pad == 0:
        return a
    widths = [(0, 0)] * a.ndim
    widths[axis] = (0, pad)
    return jnp.pad(a, widths)


def _vmem_limit_bytes():
    """Generation-aware VMEM request: ~75% of physical, capped at 100 MiB."""
    try:
        cap = getattr(pltpu.get_tpu_info(), "vmem_capacity_bytes",
                      64 * 1024 * 1024)
    except Exception:  # conservative fallback (v7x-sized) if query unavailable
        cap = 64 * 1024 * 1024
    return int(min(cap * 3 // 4, 100 * 1024 * 1024))


def _fcn_head_kernel(x_ref, w3_ref, mask_ref, shift_ref, w1_ref, b1_ref,
                     o_ref, acc_ref, *, W, Cint_p):
    # x_ref    : (1, Cin_tile, M) bf16   one batch element, one Cin tile
    # w3_ref   : (3, 3*Cint_p, Cin_tile) bf16  kh-major, kw packed along rows,
    #                                          eval-BN scale pre-folded
    # mask_ref : (4, 1, M) f32   rows: [w>=1, w<=W-2, h>=1, h<=H-2]
    # shift_ref: (Cint_p, 1) f32         folded eval-BatchNorm shift
    # w1_ref   : (Cout_p, Cint_p) bf16   1x1 conv weight
    # b1_ref   : (Cout_p, 1) f32         1x1 conv bias
    # o_ref    : (1, Cout_p, M)          output (written on last k step)
    # acc_ref  : (Cint_p, M) f32 VMEM    3x3-conv accumulator across Cin tiles
    k = pl.program_id(1)

    @pl.when(k == 0)
    def _():
        acc_ref[...] = jnp.zeros_like(acc_ref)

    x = x_ref[0]                                       # (Cin_tile, M) bf16
    M = x.shape[1]

    part = None
    for kh in range(3):
        # One packed MXU matmul covers the 3 kw taps of this kh row.
        pk = jnp.dot(w3_ref[kh], x,
                     preferred_element_type=jnp.float32)   # (3*Cint_p, M)
        # Factored realignment: +-1 lane rolls + w-border masks, then one
        # row-sized roll + h-border mask (masks factor because h-validity
        # depends only on kh and w-validity only on kw).
        row = pk[Cint_p:2 * Cint_p]                                   # dw = 0
        row = row + pltpu.roll(pk[:Cint_p], shift=1, axis=1) * mask_ref[0]
        row = row + pltpu.roll(pk[2 * Cint_p:], shift=M - 1, axis=1) * mask_ref[1]
        dh = kh - 1
        if dh != 0:
            row = pltpu.roll(row, shift=(-dh * W) % M, axis=1)
            row = row * mask_ref[2 if dh == -1 else 3]
        part = row if part is None else part + row

    acc_ref[...] += part

    @pl.when(k == pl.num_programs(1) - 1)
    def _():
        # Folded BatchNorm shift + ReLU; Dropout(p=0.1) is identity in eval.
        y = jnp.maximum(acc_ref[...] + shift_ref[...], 0.0)
        # 1x1 convolution == channel matmul (bf16 on the MXU) + f32 bias.
        out = jnp.dot(w1_ref[...], y.astype(jnp.bfloat16),
                      preferred_element_type=jnp.float32) + b1_ref[...]
        o_ref[0] = out.astype(o_ref.dtype)


def fcn_head_forward(x_nchw, conv3_w, bn_gamma, bn_beta, bn_mean, bn_var,
                     conv1_w, conv1_b, eps=1e-5, out_dtype=jnp.float32,
                     cin_tile=256):
    """FCNHead (with_global=False) eval-mode forward.

    x_nchw : (N, Cin, H, W) float32
    conv3_w: (Cint, Cin, 3, 3)  3x3 conv weight (PyTorch OIHW), no bias
    bn_*   : (Cint,)            BatchNorm2d affine / running stats
    conv1_w: (Cout, Cint)       1x1 conv weight (kh=kw=1 squeezed)
    conv1_b: (Cout,)            1x1 conv bias
    returns (N, Cout, H, W) in out_dtype (default f32; pass bf16 to halve
            output HBM writeback if the consumer tolerates it)
    """
    N, Cin, H, W = x_nchw.shape
    Cint = conv3_w.shape[0]
    Cout = conv1_w.shape[0]
    M = H * W

    # Sublane-friendly channel padding + Cin reduction tiling.
    Cint_p = _round_up(Cint, 8)
    Cout_p = _round_up(Cout, 8)
    Cin_p = _round_up(Cin, 8)
    tcin = min(Cin_p, _round_up(cin_tile, 8))
    Cin_pp = _round_up(Cin_p, tcin)
    num_k = Cin_pp // tcin

    # Fold eval-mode BatchNorm: scale into the 3x3 weights, keep only a shift.
    scale = bn_gamma / jnp.sqrt(bn_var + eps)                         # (Cint,)
    shift = (bn_beta - bn_mean * scale).reshape(Cint, 1).astype(jnp.float32)
    shift = _pad_axis(shift, 0, Cint_p)

    # Pack 3x3 weights kh-major with the 3 kw taps contiguous along the
    # output-channel axis: (3, 3*Cint_p, Cin_pp).
    w3 = (conv3_w * scale[:, None, None, None]).astype(jnp.float32)
    w3 = jnp.transpose(w3, (2, 3, 0, 1))                  # (3, 3, Cint, Cin)
    w3 = _pad_axis(_pad_axis(w3, 2, Cint_p), 3, Cin_pp)
    w3 = w3.reshape(3, 3 * Cint_p, Cin_pp).astype(jnp.bfloat16)

    w1 = _pad_axis(_pad_axis(conv1_w.reshape(Cout, Cint), 0, Cout_p), 1, Cint_p)
    w1 = w1.astype(jnp.bfloat16)
    b1 = _pad_axis(conv1_b.reshape(Cout, 1).astype(jnp.float32), 0, Cout_p)

    # Host-precomputed 0/1 border masks (no per-step integer div/mod on VPU).
    w_idx = jnp.tile(jnp.arange(W, dtype=jnp.int32), H)               # (M,)
    h_idx = jnp.repeat(jnp.arange(H, dtype=jnp.int32), W)             # (M,)
    masks = jnp.stack([
        (w_idx >= 1),            # kw tap dw = -1 valid
        (w_idx <= W - 2),        # kw tap dw = +1 valid
        (h_idx >= 1),            # kh tap dh = -1 valid
        (h_idx <= H - 2),        # kh tap dh = +1 valid
    ]).astype(jnp.float32).reshape(4, 1, M)

    # NCHW with flattened spatial dims: (N, Cin_pp, H*W), H*W on lanes.
    x = _pad_axis(x_nchw.reshape(N, Cin, M).astype(jnp.bfloat16), 1, Cin_pp)

    kernel = functools.partial(_fcn_head_kernel, W=W, Cint_p=Cint_p)
    out = pl.pallas_call(
        kernel,
        out_shape=jax.ShapeDtypeStruct((N, Cout_p, M), out_dtype),
        grid=(N, num_k),
        in_specs=[
            pl.BlockSpec((1, tcin, M), lambda n, k: (n, k, 0)),
            pl.BlockSpec((3, 3 * Cint_p, tcin), lambda n, k: (0, 0, k)),
            pl.BlockSpec((4, 1, M), lambda n, k: (0, 0, 0)),
            pl.BlockSpec((Cint_p, 1), lambda n, k: (0, 0)),
            pl.BlockSpec((Cout_p, Cint_p), lambda n, k: (0, 0)),
            pl.BlockSpec((Cout_p, 1), lambda n, k: (0, 0)),
        ],
        out_specs=pl.BlockSpec((1, Cout_p, M), lambda n, k: (n, 0, 0)),
        scratch_shapes=[pltpu.VMEM((Cint_p, M), jnp.float32)],
        compiler_params=pltpu.CompilerParams(
            dimension_semantics=("parallel", "arbitrary"),
            vmem_limit_bytes=_vmem_limit_bytes()),
    )(x, w3, masks, shift, w1, b1)

    return out[:, :Cout, :].reshape(N, Cout, H, W)


if __name__ == "__main__":
    # Small shapes consistent with FCNHead: inter_channels = in_channels // 4.
    N, Cin, H, W = 2, 16, 16, 16
    Cint = Cin // 4
    Cout = 8

    key = jax.random.PRNGKey(0)
    kx, kw3, kw1, kb1, kg, kb, km, kv = jax.random.split(key, 8)

    x = jax.random.normal(kx, (N, Cin, H, W), dtype=jnp.float32)

    # Deterministic synthetic parameters (PyTorch layouts).
    conv3_w = 0.1 * jax.random.normal(kw3, (Cint, Cin, 3, 3), dtype=jnp.float32)
    conv1_w = 0.1 * jax.random.normal(kw1, (Cout, Cint), dtype=jnp.float32)
    conv1_b = 0.1 * jax.random.normal(kb1, (Cout,), dtype=jnp.float32)
    bn_gamma = 1.0 + 0.05 * jax.random.normal(kg, (Cint,), dtype=jnp.float32)
    bn_beta = 0.05 * jax.random.normal(kb, (Cint,), dtype=jnp.float32)
    bn_mean = 0.05 * jax.random.normal(km, (Cint,), dtype=jnp.float32)
    bn_var = jnp.abs(1.0 + 0.05 * jax.random.normal(kv, (Cint,), dtype=jnp.float32))

    out = fcn_head_forward(x, conv3_w, bn_gamma, bn_beta, bn_mean, bn_var,
                           conv1_w, conv1_b)
    jax.block_until_ready(out)

    # Pure-JAX f32 reference (eval semantics).
    ref = jax.lax.conv_general_dilated(
        x, conv3_w, (1, 1), "SAME",
        dimension_numbers=("NCHW", "OIHW", "NCHW"))
    scale = bn_gamma / jnp.sqrt(bn_var + 1e-5)
    ref = ref * scale[None, :, None, None] \
        + (bn_beta - bn_mean * scale)[None, :, None, None]
    ref = jnp.maximum(ref, 0.0)
    ref = jnp.einsum("nchw,oc->nohw", ref, conv1_w) + conv1_b[None, :, None, None]

    assert out.shape == (N, Cout, H, W)
    err = float(jnp.max(jnp.abs(out - ref)))
    assert err < 5e-2, f"max abs err {err}"
    print("KERNEL_OK")
</pallas_src>

<mosaic_0001>
module attributes {stable_mosaic.version = 11 : i64} {
  func.func @_fcn_head_kernel(%arg0: i32, %arg1: i32, %arg2: memref<1x16x256xbf16, #tpu.memory_space<vmem>>, %arg3: memref<3x24x16xbf16, #tpu.memory_space<vmem>>, %arg4: memref<4x1x256xf32, #tpu.memory_space<vmem>>, %arg5: memref<8x1xf32, #tpu.memory_space<vmem>>, %arg6: memref<8x8xbf16, #tpu.memory_space<vmem>>, %arg7: memref<8x1xf32, #tpu.memory_space<vmem>>, %arg8: memref<1x8x256xf32, #tpu.memory_space<vmem>>, %arg9: memref<8x256xf32, #tpu.memory_space<vmem>>) attributes {dimension_semantics = [#tpu.dimension_semantics<parallel>, #tpu.dimension_semantics<arbitrary>], iteration_bounds = array<i64: 2, 1>, scalar_prefetch = 0 : i64, scratch_operands = 1 : i64, tpu.core_type = #tpu.core_type<tc>, window_params = [{transform_indices = @transform_0, window_bounds = array<i64: 1, 16, 256>}, {transform_indices = @transform_1, window_bounds = array<i64: 3, 24, 16>}, {pipeline_mode = #tpu.pipeline_mode<synchronous>, transform_indices = @transform_2, window_bounds = array<i64: 4, 1, 256>}, {pipeline_mode = #tpu.pipeline_mode<synchronous>, transform_indices = @transform_3, window_bounds = array<i64: 8, 1>}, {pipeline_mode = #tpu.pipeline_mode<synchronous>, transform_indices = @transform_4, window_bounds = array<i64: 8, 8>}, {pipeline_mode = #tpu.pipeline_mode<synchronous>, transform_indices = @transform_5, window_bounds = array<i64: 8, 1>}, {transform_indices = @transform_6, window_bounds = array<i64: 1, 8, 256>}]} {
    %c0_i32 = arith.constant 0 : i32
    %0 = arith.cmpi eq, %arg1, %c0_i32 : i32
    %1 = arith.extui %0 : i1 to i32
    %c0_i32_0 = arith.constant 0 : i32
    %2 = arith.cmpi ne, %1, %c0_i32_0 : i32
    scf.if %2 {
      %cst_45 = arith.constant 0.000000e+00 : f32
      %77 = vector.broadcast %cst_45 : f32 to vector<8x256xf32>
      %c0_46 = arith.constant 0 : index
      %c0_47 = arith.constant 0 : index
      %78 = vector.load %arg9[%c0_46, %c0_47] : memref<8x256xf32, #tpu.memory_space<vmem>>, vector<8x256xf32>
      tpu.vector_store %arg9[%c0_46, %c0_47], %77 {strides = array<i32>} : memref<8x256xf32, #tpu.memory_space<vmem>>, vector<8x256xf32>,
    } else {
    }
    %c0 = arith.constant 0 : index
    %c0_1 = arith.constant 0 : index
    %c0_2 = arith.constant 0 : index
    %3 = vector.load %arg2[%c0, %c0_1, %c0_2] : memref<1x16x256xbf16, #tpu.memory_space<vmem>>, vector<1x16x256xbf16>
    %4 = vector.shape_cast %3 : vector<1x16x256xbf16> to vector<16x256xbf16>
    %c0_3 = arith.constant 0 : index
    %c0_4 = arith.constant 0 : index
    %c0_5 = arith.constant 0 : index
    %5 = vector.load %arg3[%c0_3, %c0_4, %c0_5] : memref<3x24x16xbf16, #tpu.memory_space<vmem>>, vector<1x24x16xbf16>
    %6 = vector.shape_cast %5 : vector<1x24x16xbf16> to vector<24x16xbf16>
    %cst = arith.constant dense<0.000000e+00> : vector<24x256xf32>
    %7 = tpu.matmul %6, %4, %cst {dimension_numbers = #tpu.dot_dimension_numbers<[1], [0], [0], [1], [0, 0, 1, 1], [], []>} : vector<24x16xbf16>, vector<16x256xbf16>, vector<24x256xf32> -> vector<24x256xf32>
    %8 = vector.extract_strided_slice %7 {offsets = [8, 0], sizes = [8, 256], strides = [1, 1]} : vector<24x256xf32> to vector<8x256xf32>
    %9 = vector.extract_strided_slice %7 {offsets = [0, 0], sizes = [8, 256], strides = [1, 1]} : vector<24x256xf32> to vector<8x256xf32>
    %c1_i32 = arith.constant 1 : i32
    %10 = tpu.dynamic_rotate %9 by %c1_i32 dim 1 : vector<8x256xf32>, i32 -> vector<8x256xf32>
    %c0_6 = arith.constant 0 : index
    %c0_7 = arith.constant 0 : index
    %c0_8 = arith.constant 0 : index
    %11 = vector.load %arg4[%c0_6, %c0_7, %c0_8] : memref<4x1x256xf32, #tpu.memory_space<vmem>>, vector<1x1x256xf32>
    %12 = vector.shape_cast %11 : vector<1x1x256xf32> to vector<1x256xf32>
    %13 = vector.broadcast %12 : vector<1x256xf32> to vector<8x256xf32>
    %14 = arith.mulf %10, %13 : vector<8x256xf32>
    %15 = arith.addf %8, %14 : vector<8x256xf32>
    %16 = vector.extract_strided_slice %7 {offsets = [16, 0], sizes = [8, 256], strides = [1, 1]} : vector<24x256xf32> to vector<8x256xf32>
    %c255_i32 = arith.constant 255 : i32
    %17 = tpu.dynamic_rotate %16 by %c255_i32 dim 1 : vector<8x256xf32>, i32 -> vector<8x256xf32>
    %c1 = arith.constant 1 : index
    %c0_9 = arith.constant 0 : index
    %c0_10 = arith.constant 0 : index
    %18 = vector.load %arg4[%c1, %c0_9, %c0_10] : memref<4x1x256xf32, #tpu.memory_space<vmem>>, vector<1x1x256xf32>
    %19 = vector.shape_cast %18 : vector<1x1x256xf32> to vector<1x256xf32>
    %20 = vector.broadcast %19 : vector<1x256xf32> to vector<8x256xf32>
    %21 = arith.mulf %17, %20 : vector<8x256xf32>
    %22 = arith.addf %15, %21 : vector<8x256xf32>
    %c16_i32 = arith.constant 16 : i32
    %23 = tpu.dynamic_rotate %22 by %c16_i32 dim 1 : vector<8x256xf32>, i32 -> vector<8x256xf32>
    %c2 = arith.constant 2 : index
    %c0_11 = arith.constant 0 : index
    %c0_12 = arith.constant 0 : index
    %24 = vector.load %arg4[%c2, %c0_11, %c0_12] : memref<4x1x256xf32, #tpu.memory_space<vmem>>, vector<1x1x256xf32>
    %25 = vector.shape_cast %24 : vector<1x1x256xf32> to vector<1x256xf32>
    %26 = vector.broadcast %25 : vector<1x256xf32> to vector<8x256xf32>
    %27 = arith.mulf %23, %26 : vector<8x256xf32>
    %c1_13 = arith.constant 1 : index
    %c0_14 = arith.constant 0 : index
    %c0_15 = arith.constant 0 : index
    %28 = vector.load %arg3[%c1_13, %c0_14, %c0_15] : memref<3x24x16xbf16, #tpu.memory_space<vmem>>, vector<1x24x16xbf16>
    %29 = vector.shape_cast %28 : vector<1x24x16xbf16> to vector<24x16xbf16>
    %cst_16 = arith.constant dense<0.000000e+00> : vector<24x256xf32>
    %30 = tpu.matmul %29, %4, %cst_16 {dimension_numbers = #tpu.dot_dimension_numbers<[1], [0], [0], [1], [0, 0, 1, 1], [], []>} : vector<24x16xbf16>, vector<16x256xbf16>, vector<24x256xf32> -> vector<24x256xf32>
    %31 = vector.extract_strided_slice %30 {offsets = [8, 0], sizes = [8, 256], strides = [1, 1]} : vector<24x256xf32> to vector<8x256xf32>
    %32 = vector.extract_strided_slice %30 {offsets = [0, 0], sizes = [8, 256], strides = [1, 1]} : vector<24x256xf32> to vector<8x256xf32>
    %c1_i32_17 = arith.constant 1 : i32
    %33 = tpu.dynamic_rotate %32 by %c1_i32_17 dim 1 : vector<8x256xf32>, i32 -> vector<8x256xf32>
    %c0_18 = arith.constant 0 : index
    %c0_19 = arith.constant 0 : index
    %c0_20 = arith.constant 0 : index
    %34 = vector.load %arg4[%c0_18, %c0_19, %c0_20] : memref<4x1x256xf32, #tpu.memory_space<vmem>>, vector<1x1x256xf32>
    %35 = vector.shape_cast %34 : vector<1x1x256xf32> to vector<1x256xf32>
    %36 = vector.broadcast %35 : vector<1x256xf32> to vector<8x256xf32>
    %37 = arith.mulf %33, %36 : vector<8x256xf32>
    %38 = arith.addf %31, %37 : vector<8x256xf32>
    %39 = vector.extract_strided_slice %30 {offsets = [16, 0], sizes = [8, 256], strides = [1, 1]} : vector<24x256xf32> to vector<8x256xf32>
    %c255_i32_21 = arith.constant 255 : i32
    %40 = tpu.dynamic_rotate %39 by %c255_i32_21 dim 1 : vector<8x256xf32>, i32 -> vector<8x256xf32>
    %c1_22 = arith.constant 1 : index
    %c0_23 = arith.constant 0 : index
    %c0_24 = arith.constant 0 : index
    %41 = vector.load %arg4[%c1_22, %c0_23, %c0_24] : memref<4x1x256xf32, #tpu.memory_space<vmem>>, vector<1x1x256xf32>
    %42 = vector.shape_cast %41 : vector<1x1x256xf32> to vector<1x256xf32>
    %43 = vector.broadcast %42 : vector<1x256xf32> to vector<8x256xf32>
    %44 = arith.mulf %40, %43 : vector<8x256xf32>
    %45 = arith.addf %38, %44 : vector<8x256xf32>
    %46 = arith.addf %27, %45 : vector<8x256xf32>
    %c2_25 = arith.constant 2 : index
    %c0_26 = arith.constant 0 : index
    %c0_27 = arith.constant 0 : index
    %47 = vector.load %arg3[%c2_25, %c0_26, %c0_27] : memref<3x24x16xbf16, #tpu.memory_space<vmem>>, vector<1x24x16xbf16>
    %48 = vector.shape_cast %47 : vector<1x24x16xbf16> to vector<24x16xbf16>
    %cst_28 = arith.constant dense<0.000000e+00> : vector<24x256xf32>
    %49 = tpu.matmul %48, %4, %cst_28 {dimension_numbers = #tpu.dot_dimension_numbers<[1], [0], [0], [1], [0, 0, 1, 1], [], []>} : vector<24x16xbf16>, vector<16x256xbf16>, vector<24x256xf32> -> vector<24x256xf32>
    %50 = vector.extract_strided_slice %49 {offsets = [8, 0], sizes = [8, 256], strides = [1, 1]} : vector<24x256xf32> to vector<8x256xf32>
    %51 = vector.extract_strided_slice %49 {offsets = [0, 0], sizes = [8, 256], strides = [1, 1]} : vector<24x256xf32> to vector<8x256xf32>
    %c1_i32_29 = arith.constant 1 : i32
    %52 = tpu.dynamic_rotate %51 by %c1_i32_29 dim 1 : vector<8x256xf32>, i32 -> vector<8x256xf32>
    %c0_30 = arith.constant 0 : index
    %c0_31 = arith.constant 0 : index
    %c0_32 = arith.constant 0 : index
    %53 = vector.load %arg4[%c0_30, %c0_31, %c0_32] : memref<4x1x256xf32, #tpu.memory_space<vmem>>, vector<1x1x256xf32>
    %54 = vector.shape_cast %53 : vector<1x1x256xf32> to vector<1x256xf32>
    %55 = vector.broadcast %54 : vector<1x256xf32> to vector<8x256xf32>
    %56 = arith.mulf %52, %55 : vector<8x256xf32>
    %57 = arith.addf %50, %56 : vector<8x256xf32>
    %58 = vector.extract_strided_slice %49 {offsets = [16, 0], sizes = [8, 256], strides = [1, 1]} : vector<24x256xf32> to vector<8x256xf32>
    %c255_i32_33 = arith.constant 255 : i32
    %59 = tpu.dynamic_rotate %58 by %c255_i32_33 dim 1 : vector<8x256xf32>, i32 -> vector<8x256xf32>
    %c1_34 = arith.constant 1 : index
    %c0_35 = arith.constant 0 : index
    %c0_36 = arith.constant 0 : index
    %60 = vector.load %arg4[%c1_34, %c0_35, %c0_36] : memref<4x1x256xf32, #tpu.memory_space<vmem>>, vector<1x1x256xf32>
    %61 = vector.shape_cast %60 : vector<1x1x256xf32> to vector<1x256xf32>
    %62 = vector.broadcast %61 : vector<1x256xf32> to vector<8x256xf32>
    %63 = arith.mulf %59, %62 : vector<8x256xf32>
    %64 = arith.addf %57, %63 : vector<8x256xf32>
    %c240_i32 = arith.constant 240 : i32
    %65 = tpu.dynamic_rotate %64 by %c240_i32 dim 1 : vector<8x256xf32>, i32 -> vector<8x256xf32>
    %c3 = arith.constant 3 : index
    %c0_37 = arith.constant 0 : index
    %c0_38 = arith.constant 0 : index
    %66 = vector.load %arg4[%c3, %c0_37, %c0_38] : memref<4x1x256xf32, #tpu.memory_space<vmem>>, vector<1x1x256xf32>
    %67 = vector.shape_cast %66 : vector<1x1x256xf32> to vector<1x256xf32>
    %68 = vector.broadcast %67 : vector<1x256xf32> to vector<8x256xf32>
    %69 = arith.mulf %65, %68 : vector<8x256xf32>
    %70 = arith.addf %46, %69 : vector<8x256xf32>
    %c0_39 = arith.constant 0 : index
    %c0_40 = arith.constant 0 : index
    %71 = vector.load %arg9[%c0_39, %c0_40] : memref<8x256xf32, #tpu.memory_space<vmem>>, vector<8x256xf32>
    %72 = arith.addf %71, %70 : vector<8x256xf32>
    %c0_41 = arith.constant 0 : index
    %c0_42 = arith.constant 0 : index
    %73 = vector.load %arg9[%c0_41, %c0_42] : memref<8x256xf32, #tpu.memory_space<vmem>>, vector<8x256xf32>
    tpu.vector_store %arg9[%c0_41, %c0_42], %72 {strides = array<i32>} : memref<8x256xf32, #tpu.memory_space<vmem>>, vector<8x256xf32>,
    %c0_i32_43 = arith.constant 0 : i32
    %74 = arith.cmpi eq, %arg1, %c0_i32_43 : i32
    %75 = arith.extui %74 : i1 to i32
    %c0_i32_44 = arith.constant 0 : i32
    %76 = arith.cmpi ne, %75, %c0_i32_44 : i32
    scf.if %76 {
      %c0_45 = arith.constant 0 : index
      %c0_46 = arith.constant 0 : index
      %77 = vector.load %arg9[%c0_45, %c0_46] : memref<8x256xf32, #tpu.memory_space<vmem>>, vector<8x256xf32>
      %c0_47 = arith.constant 0 : index
      %c0_48 = arith.constant 0 : index
      %78 = vector.load %arg5[%c0_47, %c0_48] : memref<8x1xf32, #tpu.memory_space<vmem>>, vector<8x1xf32>
      %79 = vector.broadcast %78 : vector<8x1xf32> to vector<8x256xf32>
      %80 = arith.addf %77, %79 : vector<8x256xf32>
      %cst_49 = arith.constant 0.000000e+00 : f32
      %81 = vector.broadcast %cst_49 : f32 to vector<8x256xf32>
      %82 = arith.maximumf %80, %81 : vector<8x256xf32>
      %c0_50 = arith.constant 0 : index
      %c0_51 = arith.constant 0 : index
      %83 = vector.load %arg6[%c0_50, %c0_51] : memref<8x8xbf16, #tpu.memory_space<vmem>>, vector<8x8xbf16>
      %84 = arith.truncf %82 : vector<8x256xf32> to vector<8x256xbf16>
      %cst_52 = arith.constant dense<0.000000e+00> : vector<8x256xf32>
      %85 = tpu.matmul %83, %84, %cst_52 {dimension_numbers = #tpu.dot_dimension_numbers<[1], [0], [0], [1], [0, 0, 1, 1], [], []>} : vector<8x8xbf16>, vector<8x256xbf16>, vector<8x256xf32> -> vector<8x256xf32>
      %c0_53 = arith.constant 0 : index
      %c0_54 = arith.constant 0 : index
      %86 = vector.load %arg7[%c0_53, %c0_54] : memref<8x1xf32, #tpu.memory_space<vmem>>, vector<8x1xf32>
      %87 = vector.broadcast %86 : vector<8x1xf32> to vector<8x256xf32>
      %88 = arith.addf %85, %87 : vector<8x256xf32>
      %c0_55 = arith.constant 0 : index
      %c0_56 = arith.constant 0 : index
      %c0_57 = arith.constant 0 : index
      %89 = vector.load %arg8[%c0_55, %c0_56, %c0_57] : memref<1x8x256xf32, #tpu.memory_space<vmem>>, vector<1x8x256xf32>
      %90 = vector.shape_cast %89 : vector<1x8x256xf32> to vector<8x256xf32>
      %91 = vector.shape_cast %88 : vector<8x256xf32> to vector<1x8x256xf32>
      tpu.vector_store %arg8[%c0_55, %c0_56, %c0_57], %91 {strides = array<i32>} : memref<1x8x256xf32, #tpu.memory_space<vmem>>, vector<1x8x256xf32>,
    } else {
    }
    return
  }
  func.func @transform_0(%arg0: i32, %arg1: i32) -> (i32, i32, i32) {
    %c0_i32 = arith.constant 0 : i32
    %c0_i32_0 = arith.constant 0 : i32
    return %arg0, %arg1, %c0_i32 : i32, i32, i32
  }
  func.func @transform_1(%arg0: i32, %arg1: i32) -> (i32, i32, i32) {
    %c0_i32 = arith.constant 0 : i32
    %c0_i32_0 = arith.constant 0 : i32
    %c0_i32_1 = arith.constant 0 : i32
    return %c0_i32, %c0_i32_0, %arg1 : i32, i32, i32
  }
  func.func @transform_2(%arg0: i32, %arg1: i32) -> (i32, i32, i32) {
    %c0_i32 = arith.constant 0 : i32
    %c0_i32_0 = arith.constant 0 : i32
    %c0_i32_1 = arith.constant 0 : i32
    %c0_i32_2 = arith.constant 0 : i32
    return %c0_i32, %c0_i32_0, %c0_i32_1 : i32, i32, i32
  }
  func.func @transform_3(%arg0: i32, %arg1: i32) -> (i32, i32) {
    %c0_i32 = arith.constant 0 : i32
    %c0_i32_0 = arith.constant 0 : i32
    %c0_i32_1 = arith.constant 0 : i32
    return %c0_i32, %c0_i32_0 : i32, i32
  }
  func.func @transform_4(%arg0: i32, %arg1: i32) -> (i32, i32) {
    %c0_i32 = arith.constant 0 : i32
    %c0_i32_0 = arith.constant 0 : i32
    %c0_i32_1 = arith.constant 0 : i32
    return %c0_i32, %c0_i32_0 : i32, i32
  }
  func.func @transform_5(%arg0: i32, %arg1: i32) -> (i32, i32) {
    %c0_i32 = arith.constant 0 : i32
    %c0_i32_0 = arith.constant 0 : i32
    %c0_i32_1 = arith.constant 0 : i32
    return %c0_i32, %c0_i32_0 : i32, i32
  }
  func.func @transform_6(%arg0: i32, %arg1: i32) -> (i32, i32, i32) {
    %c0_i32 = arith.constant 0 : i32
    %c0_i32_0 = arith.constant 0 : i32
    %c0_i32_1 = arith.constant 0 : i32
    return %arg0, %c0_i32, %c0_i32_0 : i32, i32, i32
  }
}

</mosaic_0001>

<llo_original>
// kernel: tpu_custom_call.1
$region0: #{tpu_custom_call.1}
  #allocation0 [shape = 'u32[]', space=smem, size = 0x4, offset = 0x4, fixed_abs, tag = 'smem constant byte address 0x4 - core index']
  #allocation1 [shape = 'u32[144,128]{1,0:T(1,128)}', space=vmem, size = 0x12000, scoped, tag = 'internal scratch']
  #allocation2 [shape = 'f32[8,256]{1,0:T(8,128)}', space=vmem, size = 0x2000, scoped, tag = 'scratch operand']
  %s0 = inlined_call_operand.vmem [shape: bf16[2,16,256], index: 0, kind: input, shape index: {}]
  %s1 = inlined_call_operand.vmem [shape: bf16[3,24,16], index: 1, kind: input, shape index: {}]
  %s2 = inlined_call_operand.vmem [shape: f32[4,1,256], index: 2, kind: input, shape index: {}]
  %s3 = inlined_call_operand.vmem [shape: f32[8,1], index: 3, kind: input, shape index: {}]
  %s4 = inlined_call_operand.vmem [shape: bf16[8,8], index: 4, kind: input, shape index: {}]
  %s5 = inlined_call_operand.vmem [shape: f32[8,1], index: 5, kind: input, shape index: {}]
  %s6 = inlined_call_operand.hbm [shape: f32[2,8,256], index: 6, kind: output, shape index: {}]
  %s7 = sld [smem:[#allocation0]]
  $region65: #{tpu_custom_call.1} parent=0
    _
  %s9 = ssub.s32 1, %s7
  %s10 = scalar_select 0, %s9, %s7
  $region1: #{tpu_custom_call.1} parent=0
    #allocation3 [shape = 'u8[16384]{0}', space=vmem, size = 0x4000, scoped, tag = 'output window, operand 0']
    #allocation4 [shape = 's32[2]{0}', space=sflag, size = 0x8, scoped, tag = 'scoped memory for tpu_custom_call.1']
    %11 = vsyncpa [#allocation4], 0
    %s12 = scalar_lea.sflag [#allocation4], 1
    %13 = vsyncpa %s12, 0
    loop: start=0, step=1, limit=4
    $region2: #{tpu_custom_call.1} parent=1 // loop_pre_header
      _
    $region3: #{tpu_custom_call.1} parent=1 // loop_header
      %s15 = sphi 0, %s19
      %p16 = scmp.ge.s32.totalorder %s15, 4
      %s22 = sphi 0, %s34
      %s23 = sphi 0, %s30
      %s24 = sphi 0, %s22
      %s25 = sphi 0, %s23
      %s26 = sphi 0, %s24
      %s27 = sphi 0, %s25
      %s39 = sphi 0, %s41
      %s42 = sphi 0, %s39
      %s43 = sphi 0, %s42
      %s59 = sphi 0, %s43
      %s65 = sphi 0, %s67
      %s68 = sphi 0, %s65
      %s69 = sphi 0, %s68
      %s85 = sphi 0, %s69
      %s89 = sphi 0, %s89
      %s91 = sphi 0, %s89
      %s92 = sphi 0, %s91
      %s106 = sphi 0, %s92
      %s110 = sphi 0, %s110
      %s112 = sphi 0, %s110
      %s113 = sphi 0, %s112
      %s127 = sphi 0, %s113
      %s131 = sphi 0, %s131
      %s133 = sphi 0, %s131
      %s134 = sphi 0, %s133
      %s148 = sphi 0, %s134
      %s152 = sphi 0, %s152
      %s154 = sphi 0, %s152
      %s155 = sphi 0, %s154
      %s169 = sphi 0, %s155
      %s175 = sphi 0, %s177
      %s178 = sphi 0, %s175
      %s179 = sphi 0, %s178
      %s195 = sphi 0, %s179
    $region4: #{tpu_custom_call.1} parent=1 // loop_header_branch
      %18 = sbr.rel (%p16) target = $region8
    $region5: #{tpu_custom_call.1} parent=1 // loop_body
      %s20 = ssub.s32 %s15, 1
      %s21 = ssub.s32 %s15, 2
      %s28 = sadd.s32 1, %s23
      %p29 = scmp.ge.s32.totalorder %s28, 1
      %s30 = scalar_select %p29, 0, %s28
      %s31 = sadd.s32 1, %s22
      %s32 = scalar_select %p29, %s31, %s22
      %p33 = scmp.ge.s32.totalorder %s32, 2
      %s34 = scalar_select %p33, 0, %s32
      %s35 = ssub.s32 %s22, %s34
      %s36 = ssub.s32 %s23, %s30
      %s37 = sor.u32 %s35, %s36
      %p38 = scmp.eq.s32.totalorder %s37, 0
      %s40 = sadd.s32 %s39, 1
      %s41 = scalar_select %p38, %s39, %s40
      %p44 = pneg %p38
      %p45 = scmp.eq.s32.totalorder %s15, 1
      %p46 = por %p44, %p45
      %p47 = scmp.ne.s32.totalorder %s39, %s42
      %p48 = scmp.eq.s32.totalorder %s15, 0
      %p49 = por %p47, %p48
      %p50 = scmp.ne.s32.totalorder %s39, %s42
      %p51 = scmp.eq.s32.totalorder %s20, 1
      %p52 = por %p50, %p51
      %p53 = scmp.ne.s32.totalorder %s42, %s43
      %p54 = scmp.eq.s32.totalorder %s20, 0
      %p55 = por %p53, %p54
      %p56 = scmp.ne.s32.totalorder %s42, %s43
      %p57 = scmp.eq.s32.totalorder %s21, 1
      %p58 = por %p56, %p57
      %p60 = scmp.ne.s32.totalorder %s43, %s59
      %p61 = scmp.eq.s32.totalorder %s21, 0
      %p62 = por %p60, %p61
      %s63 = ssub.s32 %s23, %s30
      %p64 = scmp.eq.s32.totalorder %s63, 0
      %s66 = sadd.s32 %s65, 1
      %s67 = scalar_select %p64, %s65, %s66
      %p70 = pneg %p64
      %p71 = scmp.eq.s32.totalorder %s15, 1
      %p72 = por %p70, %p71
      %p73 = scmp.ne.s32.totalorder %s65, %s68
      %p74 = scmp.eq.s32.totalorder %s15, 0
      %p75 = por %p73, %p74
      %p76 = scmp.ne.s32.totalorder %s65, %s68
      %p77 = scmp.eq.s32.totalorder %s20, 1
      %p78 = por %p76, %p77
      %p79 = scmp.ne.s32.totalorder %s68, %s69
      %p80 = scmp.eq.s32.totalorder %s20, 0
      %p81 = por %p79, %p80
      %p82 = scmp.ne.s32.totalorder %s68, %s69
      %p83 = scmp.eq.s32.totalorder %s21, 1
      %p84 = por %p82, %p83
      %p86 = scmp.ne.s32.totalorder %s69, %s85
      %p87 = scmp.eq.s32.totalorder %s21, 0
      %p88 = por %p86, %p87
      %s90 = sadd.s32 %s89, 1
      %p93 = scmp.eq.s32.totalorder %s15, 1
      %p94 = scmp.ne.s32.totalorder %s89, %s91
      %p95 = scmp.eq.s32.totalorder %s15, 0
      %p96 = por %p94, %p95
      %p97 = scmp.ne.s32.totalorder %s89, %s91
      %p98 = scmp.eq.s32.totalorder %s20, 1
      %p99 = por %p97, %p98
      %p100 = scmp.ne.s32.totalorder %s91, %s92
      %p101 = scmp.eq.s32.totalorder %s20, 0
      %p102 = por %p100, %p101
      %p103 = scmp.ne.s32.totalorder %s91, %s92
      %p104 = scmp.eq.s32.totalorder %s21, 1
      %p105 = por %p103, %p104
      %p107 = scmp.ne.s32.totalorder %s92, %s106
      %p108 = scmp.eq.s32.totalorder %s21, 0
      %p109 = por %p107, %p108
      %s111 = sadd.s32 %s110, 1
      %p114 = scmp.eq.s32.totalorder %s15, 1
      %p115 = scmp.ne.s32.totalorder %s110, %s112
      %p116 = scmp.eq.s32.totalorder %s15, 0
      %p117 = por %p115, %p116
      %p118 = scmp.ne.s32.totalorder %s110, %s112
      %p119 = scmp.eq.s32.totalorder %s20, 1
      %p120 = por %p118, %p119
      %p121 = scmp.ne.s32.totalorder %s112, %s113
      %p122 = scmp.eq.s32.totalorder %s20, 0
      %p123 = por %p121, %p122
      %p124 = scmp.ne.s32.totalorder %s112, %s113
      %p125 = scmp.eq.s32.totalorder %s21, 1
      %p126 = por %p124, %p125
      %p128 = scmp.ne.s32.totalorder %s113, %s127
      %p129 = scmp.eq.s32.totalorder %s21, 0
      %p130 = por %p128, %p129
      %s132 = sadd.s32 %s131, 1
      %p135 = scmp.eq.s32.totalorder %s15, 1
      %p136 = scmp.ne.s32.totalorder %s131, %s133
      %p137 = scmp.eq.s32.totalorder %s15, 0
      %p138 = por %p136, %p137
      %p139 = scmp.ne.s32.totalorder %s131, %s133
      %p140 = scmp.eq.s32.totalorder %s20, 1
      %p141 = por %p139, %p140
      %p142 = scmp.ne.s32.totalorder %s133, %s134
      %p143 = scmp.eq.s32.totalorder %s20, 0
      %p144 = por %p142, %p143
      %p145 = scmp.ne.s32.totalorder %s133, %s134
      %p146 = scmp.eq.s32.totalorder %s21, 1
      %p147 = por %p145, %p146
      %p149 = scmp.ne.s32.totalorder %s134, %s148
      %p150 = scmp.eq.s32.totalorder %s21, 0
      %p151 = por %p149, %p150
      %s153 = sadd.s32 %s152, 1
      %p156 = scmp.eq.s32.totalorder %s15, 1
      %p157 = scmp.ne.s32.totalorder %s152, %s154
      %p158 = scmp.eq.s32.totalorder %s15, 0
      %p159 = por %p157, %p158
      %p160 = scmp.ne.s32.totalorder %s152, %s154
      %p161 = scmp.eq.s32.totalorder %s20, 1
      %p162 = por %p160, %p161
      %p163 = scmp.ne.s32.totalorder %s154, %s155
      %p164 = scmp.eq.s32.totalorder %s20, 0
      %p165 = por %p163, %p164
      %p166 = scmp.ne.s32.totalorder %s154, %s155
      %p167 = scmp.eq.s32.totalorder %s21, 1
      %p168 = por %p166, %p167
      %p170 = scmp.ne.s32.totalorder %s155, %s169
      %p171 = scmp.eq.s32.totalorder %s21, 0
      %p172 = por %p170, %p171
      %s173 = ssub.s32 %s22, %s34
      %p174 = scmp.eq.s32.totalorder %s173, 0
      %s176 = sadd.s32 %s175, 1
      %s177 = scalar_select %p174, %s175, %s176
      %p180 = pneg %p174
      %p181 = scmp.eq.s32.totalorder %s15, 1
      %p182 = por %p180, %p181
      %p183 = scmp.ne.s32.totalorder %s175, %s178
      %p184 = scmp.eq.s32.totalorder %s15, 0
      %p185 = por %p183, %p184
      %p186 = scmp.ne.s32.totalorder %s175, %s178
      %p187 = scmp.eq.s32.totalorder %s20, 1
      %p188 = por %p186, %p187
      %p189 = scmp.ne.s32.totalorder %s178, %s179
      %p190 = scmp.eq.s32.totalorder %s20, 0
      %p191 = por %p189, %p190
      %p192 = scmp.ne.s32.totalorder %s178, %s179
      %p193 = scmp.eq.s32.totalorder %s21, 1
      %p194 = por %p192, %p193
      %p196 = scmp.ne.s32.totalorder %s179, %s195
      %p197 = scmp.eq.s32.totalorder %s21, 0
      %p198 = por %p196, %p197
      %p199 = scmp.le.s32.totalorder 1, %s15
      %p200 = scmp.lt.s32.totalorder %s15, 3
      %p201 = pnand %p199, %p200
      %p202 = pneg %p201
      // Predicated region
      $region9: #{tpu_custom_call.1} parent=5 // pred_check
        _
      $region10: #{tpu_custom_call.1} parent=5 // pred_check_branch
        %204 = sbr.rel (%p201) target = $region12
      $region11: #{tpu_custom_call.1} parent=5 // pred_region
        %s205 = ssub.s32 %s15, 1
        // Predicated region
        $region13: #{tpu_custom_call.1} parent=11 // pred_check
          %p206 = pneg %p81
        $region14: #{tpu_custom_call.1} parent=11 // pred_check_branch
          %208 = sbr.rel (%p206) target = $region16
        $region15: #{tpu_custom_call.1} parent=11 // pred_region
          %p209 = scmp.lt.s32.totalorder %s25, 0
          %s210 = scalar_select %p209, %s25, 0
          %s211 = smul.addr %s210, 4
          %s212 = scalar_lea.vmem %s1, %s211
        $region16: #{tpu_custom_call.1} parent=11 // pred_fallthru
          _
        // Predicated region
        $region17: #{tpu_custom_call.1} parent=11 // pred_check
          %p213 = pneg %p102
        $region18: #{tpu_custom_call.1} parent=11 // pred_check_branch
          %215 = sbr.rel (%p213) target = $region20
        $region19: #{tpu_custom_call.1} parent=11 // pred_region
          _
        $region20: #{tpu_custom_call.1} parent=11 // pred_fallthru
          _
        // Predicated region
        $region21: #{tpu_custom_call.1} parent=11 // pred_check
          %p216 = pneg %p123
        $region22: #{tpu_custom_call.1} parent=11 // pred_check_branch
          %218 = sbr.rel (%p216) target = $region24
        $region23: #{tpu_custom_call.1} parent=11 // pred_region
          _
        $region24: #{tpu_custom_call.1} parent=11 // pred_fallthru
          _
        // Predicated region
        $region25: #{tpu_custom_call.1} parent=11 // pred_check
          %p219 = pneg %p144
        $region26: #{tpu_custom_call.1} parent=11 // pred_check_branch
          %221 = sbr.rel (%p219) target = $region28
        $region27: #{tpu_custom_call.1} parent=11 // pred_region
          _
        $region28: #{tpu_custom_call.1} parent=11 // pred_fallthru
          _
        // Predicated region
        $region29: #{tpu_custom_call.1} parent=11 // pred_check
          %p222 = pneg %p165
        $region30: #{tpu_custom_call.1} parent=11 // pred_check_branch
          %224 = sbr.rel (%p222) target = $region32
        $region31: #{tpu_custom_call.1} parent=11 // pred_region
          _
        $region32: #{tpu_custom_call.1} parent=11 // pred_fallthru
          _
      $region12: #{tpu_custom_call.1} parent=5 // pred_fallthru
        _
      %p225 = scmp.lt.s32.totalorder %s15, 2
      // Predicated region
      $region33: #{tpu_custom_call.1} parent=5 // pred_check
        %p226 = pneg %p225
      $region34: #{tpu_custom_call.1} parent=5 // pred_check_branch
        %228 = sbr.rel (%p226) target = $region36
      $region35: #{tpu_custom_call.1} parent=5 // pred_region
        // Predicated region
        $region37: #{tpu_custom_call.1} parent=35 // pred_check
          %p229 = pneg %p49
        $region38: #{tpu_custom_call.1} parent=35 // pred_check_branch
          %231 = sbr.rel (%p229) target = $region40
        $region39: #{tpu_custom_call.1} parent=35 // pred_region
          %s232 = smul.u32 2, %s23
          %p233 = scmp.lt.s32.totalorder %s22, 1
          %s234 = scalar_select %p233, %s22, 1
          %p235 = scmp.lt.s32.totalorder %s232, 1
          %s236 = scalar_select %p235, %s232, 1
          %s237 = smul.addr %s236, 2
          %s238 = smul.addr %s234, 4
          %s239 = sadd.s32 %s237, %s238
          %s240 = smul.addr %s239, 4
          %s241 = scalar_lea.vmem %s0, %s240
          %s242 = smul.u32 2, %s23
        $region40: #{tpu_custom_call.1} parent=35 // pred_fallthru
          _
      $region36: #{tpu_custom_call.1} parent=5 // pred_fallthru
        _
      %p243 = scmp.le.s32.totalorder 1, %s15
      %p244 = scmp.lt.s32.totalorder %s15, 3
      %p245 = pnand %p243, %p244
      %p246 = pneg %p245
      // Predicated region
      $region41: #{tpu_custom_call.1} parent=5 // pred_check
        _
      $region42: #{tpu_custom_call.1} parent=5 // pred_check_branch
        %248 = sbr.rel (%p245) target = $region44
      $region43: #{tpu_custom_call.1} parent=5 // pred_region
        %s249 = ssub.s32 %s15, 1
        %s250 = smul.u32 2, %s25
        %p251 = scmp.lt.s32.totalorder %s24, 1
        %s252 = scalar_select %p251, %s24, 1
        %p253 = scmp.lt.s32.totalorder %s250, 1
        %s254 = scalar_select %p253, %s250, 1
        %s255 = smul.addr %s254, 2
        %s256 = smul.addr %s252, 4
        %s257 = sadd.s32 %s255, %s256
        %s258 = smul.addr %s257, 4
        %s259 = scalar_lea.vmem %s0, %s258
        %p260 = pneg %p55
        %p261 = pneg %p52
        %p262 = scmp.lt.s32.totalorder %s25, 0
        %s263 = scalar_select %p262, %s25, 0
        %s264 = smul.addr %s263, 4
        %s265 = scalar_lea.vmem %s1, %s264
        %p266 = pneg %p81
        %p267 = pneg %p78
        %p268 = pneg %p102
        %p269 = pneg %p99
        %p270 = pneg %p123
        %p271 = pneg %p120
        %p272 = pneg %p144
        %p273 = pneg %p141
        %p274 = pneg %p165
        %p275 = pneg %p162
        %p276 = pneg %p191
        %p277 = pneg %p188
        %s278 = sand.u32 %s178, 1
        %s279 = scalar_lea.sflag [#allocation4], %s278
        %s280 = sand.u32 %s178, 1
        %s281 = smul.addr %s280, 16
        %s282 = scalar_lea.vmem [#allocation3], %s281
        %s283 = smul.u32 2, %s25
        %p284 = scmp.lt.s32.totalorder %s24, 1
        %s285 = scalar_select %p284, %s24, 1
        %p286 = scmp.lt.s32.totalorder %s283, 1
        %s287 = scalar_select %p286, %s283, 1
        %s288 = smul.addr %s287, 2
        %s289 = smul.addr %s285, 4
        %s290 = sadd.s32 %s288, %s289
        %s291 = smul.addr %s290, 4
        %s292 = scalar_lea.vmem %s0, %s291
        %s293 = smul.u32 2, %s25
        %p294 = scmp.lt.s32.totalorder %s25, 0
        %s295 = scalar_select %p294, %s25, 0
        %s296 = smul.addr %s295, 4
        %s297 = scalar_lea.vmem %s1, %s296
        %p299 = scmp.eq.s32.totalorder %s25, 0
        // Predicated region
        $region45: #{tpu_custom_call.1} parent=43 // pred_check
          %p300 = pneg %p299
        $region46: #{tpu_custom_call.1} parent=43 // pred_check_branch
          %302 = sbr.rel (%p300) target = $region48
        $region47: #{tpu_custom_call.1} parent=43 // pred_region
          %303 = vst [vmem:[#allocation2] sm:$0xff] 0.0
          %304 = vst [vmem:[#allocation2 + $0x8] sm:$0xff] 0.0
        $region48: #{tpu_custom_call.1} parent=43 // pred_fallthru
          _
        %v305 = vld [vmem:[%s292] sm:$0xff]
        %v306 = vld [vmem:[%s292 + $0x8] sm:$0xff]
        %v307 = vld [vmem:[%s297] sm:$0xf]
        %v308 = vld [vmem:[%s297 + $0x4] sm:$0xf]
        %v309 = vld [vmem:[%s297 + $0x8] sm:$0xf]
        %v313 = vunpack.c.l.b16 %v307
        %v314 = vunpack.c.l.b16 %v308
        %v315 = vunpack.c.l.b16 %v309
        %v316 = vpack.c.b16 %v314, %v313
        %v317 = vpack.c.b16 %v315, %v315
        %v320 = vunpack.c.l.b16 %v305
        %v321 = vunpack.c.h.b16 %v305
        %v322 = vunpack.c.l.b16 %v306
        %v323 = vunpack.c.h.b16 %v306
        %v324 = vpack.c.b16 %v322, %v320
        %v325 = vpack.c.b16 %v323, %v321
        %vm328 = vcmask 130048
        %v330 = vsel %vm328, %v316, 0
        %v333 = vsel %vm328, %v317, 0
        %335 = vmatprep.subr.bf16.mxu0 0
        %336 = vmatpush1.bf16.msra.mxu0 0
        %337 = vmatprep.subr.bf16.mxu0 0
        %338 = vmatpush1.bf16.msra.mxu0 0
        %339 = vmatprep.subr.bf16.mxu0 0
        %340 = vmatpush1.bf16.msra.mxu0 0
        %341 = vmatprep.subr.bf16.mxu0 0
        %342 = vmatpush1.bf16.msra.mxu0 0
        %343 = vmatprep.subr.bf16.mxu0 0
        %344 = vmatpush1.bf16.msra.mxu0 0
        %345 = vmatprep.subr.bf16.mxu0 0
        %346 = vmatpush1.bf16.msra.mxu0 0
        %347 = vmatprep.subr.bf16.mxu0 0
        %348 = vmatpush1.bf16.msra.mxu0 0
        %349 = vmatprep.subr.bf16.mxu0 %v325
        %350 = vmatpush1.bf16.msra.mxu0 %v324
        %351 = vmatprep.subr.bf16.mxu0 0
        %352 = vmatpush2.bf16.msra.mxu0 0
        %353 = vmatprep.subr.bf16.mxu0 0
        %354 = vmatpush2.bf16.msra.mxu0 0
        %355 = vmatprep.subr.bf16.mxu0 0
        %356 = vmatpush2.bf16.msra.mxu0 0
        %357 = vmatprep.subr.bf16.mxu0 0
        %358 = vmatpush2.bf16.msra.mxu0 0
        %359 = vmatprep.subr.bf16.mxu0 0
        %360 = vmatpush2.bf16.msra.mxu0 0
        %361 = vmatprep.subr.bf16.mxu0 0
        %362 = vmatpush2.bf16.msra.mxu0 0
        %363 = vmatprep.subr.bf16.mxu0 0
        %364 = vmatpush2.bf16.msra.mxu0 0
        %365 = vmatprep.subr.bf16.mxu0 0
        %366 = vmatpush2.bf16.msra.mxu0 0
        %367 = vmatprep.mubr.bf16.mxu0 0
        %368 = vmatmul.mubr.bf16.gmra.mxu0 %v330
        %v369 = vpop.f32.mrf.mxu0
        %v370 = vadd.f32 0.0, %v369
        %v371 = vpop.f32.mrf.mxu0
        %v372 = vadd.f32 0.0, %v371
        %v373 = vpop.f32.mrf.mxu0
        %v374 = vadd.f32 0.0, %v373
        %v375 = vpop.f32.mrf.mxu0
        %v376 = vadd.f32 0.0, %v375
        %377 = vmatprep.mubr.bf16.mxu0 0
        %378 = vmatmul.mubr.bf16.gmra.mxu0 %v333
        %v379 = vpop.f32.mrf.mxu0
        %v380 = vadd.f32 0.0, %v379
        %v381 = vpop.f32.mrf.mxu0
        %v382 = vadd.f32 0.0, %v381
        %v383 = vpop.f32.mrf.mxu0
        %v384 = vpop.f32.mrf.mxu0
        %385 = vdwg.mxu0
        %386 = vrot.lane.b32.xlu0 %v370, 1
        %v387 = vpop.permute.xlu0 %386
        %388 = vrot.lane.b32.xlu0 %v372, 1
        %v389 = vpop.permute.xlu0 %388
        %v390 = vlaneseq
        %v391 = vand.u32 %v390, 127
        %vm392 = vcmp.lt.s32.totalorder %v391, 1
        %v393 = vsel %vm392, %v387, %v389
        %v394 = vsel %vm392, %v389, %v387
        %v395 = vld [vmem:[%s2] sm:$0x3]
        %v397 = vlaneseq
        %v398 = vshrl.u32 %v397, 7
        %v399 = vsub.s32 0, %v398
        %v400 = vrot.slane %v395, %v399
        %v401 = vlaneseq
        %v402 = vshrl.u32 %v401, 7
        %v403 = vsub.s32 1, %v402
        %v404 = vrot.slane %v395, %v403
        %v407 = vmul.f32 %v394, %v400
        %v408 = vmul.f32 %v393, %v404
        %v409 = vadd.f32 %v374, %v407
        %v410 = vadd.f32 %v376, %v408
        %411 = vrot.lane.b32.xlu0 %v380, 127
        %v412 = vpop.permute.xlu0 %411
        %413 = vrot.lane.b32.xlu0 %v382, 127
        %v414 = vpop.permute.xlu0 %413
        %vm415 = vcmp.lt.s32.totalorder %v391, 127
        %v416 = vsel %vm415, %v412, %v414
        %v417 = vsel %vm415, %v414, %v412
        %s418 = scalar_lea.vmem %s2, 2
        %v419 = vld [vmem:[%s418] sm:$0x3]
        %v421 = vlaneseq
        %v422 = vshrl.u32 %v421, 7
        %v423 = vsub.s32 0, %v422
        %v424 = vrot.slane %v419, %v423
        %v425 = vlaneseq
        %v426 = vshrl.u32 %v425, 7
        %v427 = vsub.s32 1, %v426
        %v428 = vrot.slane %v419, %v427
        %v431 = vmul.f32 %v416, %v424
        %v432 = vmul.f32 %v417, %v428
        %v433 = vadd.f32 %v409, %v431
        %v434 = vadd.f32 %v410, %v432
        %435 = vrot.lane.b32.xlu0 %v433, 16
        %v436 = vpop.permute.xlu0 %435
        %437 = vrot.lane.b32.xlu0 %v434, 16
        %v438 = vpop.permute.xlu0 %437
        %vm439 = vcmp.lt.s32.totalorder %v391, 16
        %v440 = vsel %vm439, %v436, %v438
        %v441 = vsel %vm439, %v438, %v436
        %s442 = scalar_lea.vmem %s2, 4
        %v443 = vld [vmem:[%s442] sm:$0x3]
        %v445 = vlaneseq
        %v446 = vshrl.u32 %v445, 7
        %v447 = vsub.s32 0, %v446
        %v448 = vrot.slane %v443, %v447
        %v449 = vlaneseq
        %v450 = vshrl.u32 %v449, 7
        %v451 = vsub.s32 1, %v450
        %v452 = vrot.slane %v443, %v451
        %v455 = vmul.f32 %v441, %v448
        %v456 = vmul.f32 %v440, %v452
        %s457 = scalar_lea.vmem %s297, 12
        %v458 = vld [vmem:[%s457] sm:$0xf]
        %v459 = vld [vmem:[%s457 + $0x4] sm:$0xf]
        %v460 = vld [vmem:[%s457 + $0x8] sm:$0xf]
        %v464 = vunpack.c.l.b16 %v458
        %v465 = vunpack.c.l.b16 %v459
        %v466 = vunpack.c.l.b16 %v460
        %v467 = vpack.c.b16 %v465, %v464
        %v468 = vpack.c.b16 %v466, %v466
        %v470 = vsel %vm328, %v467, 0
        %v473 = vsel %vm328, %v468, 0
        %475 = vmatprep.subr.bf16.mxu0 0
        %476 = vmatpush1.bf16.msra.mxu0 0
        %477 = vmatprep.subr.bf16.mxu0 0
        %478 = vmatpush1.bf16.msra.mxu0 0
        %479 = vmatprep.subr.bf16.mxu0 0
        %480 = vmatpush1.bf16.msra.mxu0 0
        %481 = vmatprep.subr.bf16.mxu0 0
        %482 = vmatpush1.bf16.msra.mxu0 0
        %483 = vmatprep.subr.bf16.mxu0 0
        %484 = vmatpush1.bf16.msra.mxu0 0
        %485 = vmatprep.subr.bf16.mxu0 0
        %486 = vmatpush1.bf16.msra.mxu0 0
        %487 = vmatprep.subr.bf16.mxu0 0
        %488 = vmatpush1.bf16.msra.mxu0 0
        %489 = vmatprep.subr.bf16.mxu0 %v325
        %490 = vmatpush1.bf16.msra.mxu0 %v324
        %491 = vmatprep.subr.bf16.mxu0 0
        %492 = vmatpush2.bf16.msra.mxu0 0
        %493 = vmatprep.subr.bf16.mxu0 0
        %494 = vmatpush2.bf16.msra.mxu0 0
        %495 = vmatprep.subr.bf16.mxu0 0
        %496 = vmatpush2.bf16.msra.mxu0 0
        %497 = vmatprep.subr.bf16.mxu0 0
        %498 = vmatpush2.bf16.msra.mxu0 0
        %499 = vmatprep.subr.bf16.mxu0 0
        %500 = vmatpush2.bf16.msra.mxu0 0
        %501 = vmatprep.subr.bf16.mxu0 0
        %502 = vmatpush2.bf16.msra.mxu0 0
        %503 = vmatprep.subr.bf16.mxu0 0
        %504 = vmatpush2.bf16.msra.mxu0 0
        %505 = vmatprep.subr.bf16.mxu0 0
        %506 = vmatpush2.bf16.msra.mxu0 0
        %507 = vmatprep.mubr.bf16.mxu0 0
        %508 = vmatmul.mubr.bf16.gmra.mxu0 %v470
        %v509 = vpop.f32.mrf.mxu0
        %v510 = vadd.f32 0.0, %v509
        %v511 = vpop.f32.mrf.mxu0
        %v512 = vadd.f32 0.0, %v511
        %v513 = vpop.f32.mrf.mxu0
        %v514 = vadd.f32 0.0, %v513
        %v515 = vpop.f32.mrf.mxu0
        %v516 = vadd.f32 0.0, %v515
        %517 = vmatprep.mubr.bf16.mxu0 0
        %518 = vmatmul.mubr.bf16.gmra.mxu0 %v473
        %v519 = vpop.f32.mrf.mxu0
        %v520 = vadd.f32 0.0, %v519
        %v521 = vpop.f32.mrf.mxu0
        %v522 = vadd.f32 0.0, %v521
        %v523 = vpop.f32.mrf.mxu0
        %v524 = vpop.f32.mrf.mxu0
        %525 = vdwg.mxu0
        %526 = vrot.lane.b32.xlu0 %v510, 1
        %v527 = vpop.permute.xlu0 %526
        %528 = vrot.lane.b32.xlu0 %v512, 1
        %v529 = vpop.permute.xlu0 %528
        %v530 = vsel %vm392, %v527, %v529
        %v531 = vsel %vm392, %v529, %v527
        %v532 = vmul.f32 %v531, %v400
        %v533 = vmul.f32 %v530, %v404
        %v534 = vadd.f32 %v514, %v532
        %v535 = vadd.f32 %v516, %v533
        %536 = vrot.lane.b32.xlu0 %v520, 127
        %v537 = vpop.permute.xlu0 %536
        %538 = vrot.lane.b32.xlu0 %v522, 127
        %v539 = vpop.permute.xlu0 %538
        %v540 = vsel %vm415, %v537, %v539
        %v541 = vsel %vm415, %v539, %v537
        %v542 = vmul.f32 %v540, %v424
        %v543 = vmul.f32 %v541, %v428
        %v544 = vadd.f32 %v534, %v542
        %v545 = vadd.f32 %v535, %v543
        %v546 = vadd.f32 %v455, %v544
        %v547 = vadd.f32 %v456, %v545
        %s548 = scalar_lea.vmem %s297, 24
        %v549 = vld [vmem:[%s548] sm:$0xf]
        %v550 = vld [vmem:[%s548 + $0x4] sm:$0xf]
        %v551 = vld [vmem:[%s548 + $0x8] sm:$0xf]
        %v555 = vunpack.c.l.b16 %v549
        %v556 = vunpack.c.l.b16 %v550
        %v557 = vunpack.c.l.b16 %v551
        %v558 = vpack.c.b16 %v556, %v555
        %v559 = vpack.c.b16 %v557, %v557
        %v561 = vsel %vm328, %v558, 0
        %v564 = vsel %vm328, %v559, 0
        %566 = vmatprep.subr.bf16.mxu0 0
        %567 = vmatpush1.bf16.msra.mxu0 0
        %568 = vmatprep.subr.bf16.mxu0 0
        %569 = vmatpush1.bf16.msra.mxu0 0
        %570 = vmatprep.subr.bf16.mxu0 0
        %571 = vmatpush1.bf16.msra.mxu0 0
        %572 = vmatprep.subr.bf16.mxu0 0
        %573 = vmatpush1.bf16.msra.mxu0 0
        %574 = vmatprep.subr.bf16.mxu0 0
        %575 = vmatpush1.bf16.msra.mxu0 0
        %576 = vmatprep.subr.bf16.mxu0 0
        %577 = vmatpush1.bf16.msra.mxu0 0
        %578 = vmatprep.subr.bf16.mxu0 0
        %579 = vmatpush1.bf16.msra.mxu0 0
        %580 = vmatprep.subr.bf16.mxu0 %v325
        %581 = vmatpush1.bf16.msra.mxu0 %v324
        %582 = vmatprep.subr.bf16.mxu0 0
        %583 = vmatpush2.bf16.msra.mxu0 0
        %584 = vmatprep.subr.bf16.mxu0 0
        %585 = vmatpush2.bf16.msra.mxu0 0
        %586 = vmatprep.subr.bf16.mxu0 0
        %587 = vmatpush2.bf16.msra.mxu0 0
        %588 = vmatprep.subr.bf16.mxu0 0
        %589 = vmatpush2.bf16.msra.mxu0 0
        %590 = vmatprep.subr.bf16.mxu0 0
        %591 = vmatpush2.bf16.msra.mxu0 0
        %592 = vmatprep.subr.bf16.mxu0 0
        %593 = vmatpush2.bf16.msra.mxu0 0
        %594 = vmatprep.subr.bf16.mxu0 0
        %595 = vmatpush2.bf16.msra.mxu0 0
        %596 = vmatprep.subr.bf16.mxu0 0
        %597 = vmatpush2.bf16.msra.mxu0 0
        %598 = vmatprep.mubr.bf16.mxu0 0
        %599 = vmatmul.mubr.bf16.gmra.mxu0 %v561
        %v600 = vpop.f32.mrf.mxu0
        %v601 = vadd.f32 0.0, %v600
        %v602 = vpop.f32.mrf.mxu0
        %v603 = vadd.f32 0.0, %v602
        %v604 = vpop.f32.mrf.mxu0
        %v605 = vadd.f32 0.0, %v604
        %v606 = vpop.f32.mrf.mxu0
        %v607 = vadd.f32 0.0, %v606
        %608 = vmatprep.mubr.bf16.mxu0 0
        %609 = vmatmul.mubr.bf16.gmra.mxu0 %v564
        %v610 = vpop.f32.mrf.mxu0
        %v611 = vadd.f32 0.0, %v610
        %v612 = vpop.f32.mrf.mxu0
        %v613 = vadd.f32 0.0, %v612
        %v614 = vpop.f32.mrf.mxu0
        %v615 = vpop.f32.mrf.mxu0
        %616 = vdwg.mxu0
        %617 = vrot.lane.b32.xlu0 %v601, 1
        %v618 = vpop.permute.xlu0 %617
        %619 = vrot.lane.b32.xlu0 %v603, 1
        %v620 = vpop.permute.xlu0 %619
        %v621 = vsel %vm392, %v618, %v620
        %v622 = vsel %vm392, %v620, %v618
        %v623 = vmul.f32 %v622, %v400
        %v624 = vmul.f32 %v621, %v404
        %v625 = vadd.f32 %v605, %v623
        %v626 = vadd.f32 %v607, %v624
        %627 = vrot.lane.b32.xlu0 %v611, 127
        %v628 = vpop.permute.xlu0 %627
        %629 = vrot.lane.b32.xlu0 %v613, 127
        %v630 = vpop.permute.xlu0 %629
        %v631 = vsel %vm415, %v628, %v630
        %v632 = vsel %vm415, %v630, %v628
        %v633 = vmul.f32 %v631, %v424
        %v634 = vmul.f32 %v632, %v428
        %v635 = vadd.f32 %v625, %v633
        %v636 = vadd.f32 %v626, %v634
        %637 = vrot.lane.b32.xlu0 %v635, 112
        %v638 = vpop.permute.xlu0 %637
        %639 = vrot.lane.b32.xlu0 %v636, 112
        %v640 = vpop.permute.xlu0 %639
        %vm641 = vcmp.lt.s32.totalorder %v391, 112
        %v642 = vsel %vm641, %v638, %v640
        %v643 = vsel %vm641, %v640, %v638
        %s644 = scalar_lea.vmem %s2, 6
        %v645 = vld [vmem:[%s644] sm:$0x3]
        %v647 = vlaneseq
        %v648 = vshrl.u32 %v647, 7
        %v649 = vsub.s32 0, %v648
        %v650 = vrot.slane %v645, %v649
        %v651 = vlaneseq
        %v652 = vshrl.u32 %v651, 7
        %v653 = vsub.s32 1, %v652
        %v654 = vrot.slane %v645, %v653
        %v657 = vmul.f32 %v642, %v650
        %v658 = vmul.f32 %v643, %v654
        %v659 = vadd.f32 %v546, %v657
        %v660 = vadd.f32 %v547, %v658
        %v661 = vld [vmem:[#allocation2] sm:$0xff]
        %v662 = vld [vmem:[#allocation2 + $0x8] sm:$0xff]
        %v663 = vadd.f32 %v661, %v659
        %v664 = vadd.f32 %v662, %v660
        %665 = vst [vmem:[#allocation2] sm:$0xff] %v663
        %666 = vst [vmem:[#allocation2 + $0x8] sm:$0xff] %v664
        // Predicated region
        $region49: #{tpu_custom_call.1} parent=43 // pred_check
          %p667 = pneg %p299
        $region50: #{tpu_custom_call.1} parent=43 // pred_check_branch
          %669 = sbr.rel (%p667) target = $region52
        $region51: #{tpu_custom_call.1} parent=43 // pred_region
          %v670 = vld [vmem:[#allocation2] sm:$0xff]
          %v671 = vld [vmem:[#allocation2 + $0x8] sm:$0xff]
          %v672 = vld [vmem:[%s3] sm:$0xff]
          %674 = vset.pattern.permute.xlu0 0
          %675 = vperm.xlu0 %674, %v672
          %v676 = vpop.permute.xlu0 %675
          %v678 = vadd.f32 %v670, %v676
          %v679 = vadd.f32 %v671, %v676
          %v680 = vmax.f32 %v678, 0.0
          %v681 = vmax.f32 %v679, 0.0
          %v682 = vld [vmem:[%s4] sm:$0xf]
          %v683 = vpack.c.bf16 %v680, %v680
          %v684 = vpack.c.bf16 %v681, %v681
          %v685 = vld [vmem:[%s5] sm:$0xff]
          %687 = vset.pattern.permute.xlu0 0
          %688 = vperm.xlu0 %687, %v685
          %v689 = vpop.permute.xlu0 %688
          %vm691 = vcmask 64512
          %v693 = vsel %vm691, %v682, 0
          %vm695 = vcmask 1043456
          %v697 = vsel %vm695, %v683, 0
          %v700 = vsel %vm695, %v684, 0
          %702 = vmatprep.subr.bf16.mxu0 0
          %703 = vmatpush1.bf16.msra.mxu0 0
          %704 = vmatprep.subr.bf16.mxu0 0
          %705 = vmatpush1.bf16.msra.mxu0 0
          %706 = vmatprep.subr.bf16.mxu0 0
          %707 = vmatpush1.bf16.msra.mxu0 0
          %708 = vmatprep.subr.bf16.mxu0 0
          %709 = vmatpush1.bf16.msra.mxu0 0
          %710 = vmatprep.subr.bf16.mxu0 0
          %711 = vmatpush1.bf16.msra.mxu0 0
          %712 = vmatprep.subr.bf16.mxu0 0
          %713 = vmatpush1.bf16.msra.mxu0 0
          %714 = vmatprep.subr.bf16.mxu0 0
          %715 = vmatpush1.bf16.msra.mxu0 0
          %716 = vmatprep.subr.bf16.mxu0 %v700
          %717 = vmatpush1.bf16.msra.mxu0 %v697
          %718 = vmatprep.subr.bf16.mxu0 0
          %719 = vmatpush2.bf16.msra.mxu0 0
          %720 = vmatprep.subr.bf16.mxu0 0
          %721 = vmatpush2.bf16.msra.mxu0 0
          %722 = vmatprep.subr.bf16.mxu0 0
          %723 = vmatpush2.bf16.msra.mxu0 0
          %724 = vmatprep.subr.bf16.mxu0 0
          %725 = vmatpush2.bf16.msra.mxu0 0
          %726 = vmatprep.subr.bf16.mxu0 0
          %727 = vmatpush2.bf16.msra.mxu0 0
          %728 = vmatprep.subr.bf16.mxu0 0
          %729 = vmatpush2.bf16.msra.mxu0 0
          %730 = vmatprep.subr.bf16.mxu0 0
          %731 = vmatpush2.bf16.msra.mxu0 0
          %732 = vmatprep.subr.bf16.mxu0 0
          %733 = vmatpush2.bf16.msra.mxu0 0
          %734 = vmatprep.mubr.bf16.mxu0 0
          %735 = vmatmul.mubr.bf16.gmra.mxu0 %v693
          %v736 = vpop.f32.mrf.mxu0
          %v737 = vadd.f32 %v689, %v736
          %v738 = vpop.f32.mrf.mxu0
          %v739 = vadd.f32 %v689, %v738
          %v740 = vpop.f32.mrf.mxu0
          %v741 = vpop.f32.mrf.mxu0
          %742 = vdwg.mxu0
          %743 = vst [vmem:[%s282] sm:$0xff] %v737
          %744 = vst [vmem:[%s282 + $0x8] sm:$0xff] %v739
        $region52: #{tpu_custom_call.1} parent=43 // pred_fallthru
          _
        %s745 = sand.u32 %s178, 1
        %s746 = scalar_lea.sflag [#allocation4], %s745
        %s747 = sand.u32 %s178, 1
        %s748 = smul.addr %s747, 16
        %s749 = scalar_lea.vmem [#allocation3], %s748
        // Predicated region
        $region53: #{tpu_custom_call.1} parent=43 // pred_check
          %p750 = pneg %p188
        $region54: #{tpu_custom_call.1} parent=43 // pred_check_branch
          %752 = sbr.rel (%p750) target = $region56
        $region55: #{tpu_custom_call.1} parent=43 // pred_region
          %s754 = ssub.s32 256, 256
          %755 = vsyncadd %s746, %s754
          %s756 = smul.addr %s24, 2
          %s757 = smul.addr %s756, 128
          %s758 = scalar_lea.hbm %s6, %s757
          %s760 = sshll.u32 %s749, 4
          %s761 = int_to_ptr.vmem [resolvable:$true] %s760
          %763 = dma.vmem_to_hbm [thread:$0]  %s761, 256, %s758, %s746
        $region56: #{tpu_custom_call.1} parent=43 // pred_fallthru
          _
      $region44: #{tpu_custom_call.1} parent=5 // pred_fallthru
        _
      %p764 = scmp.le.s32.totalorder 2, %s15
      // Predicated region
      $region57: #{tpu_custom_call.1} parent=5 // pred_check
        %p765 = pneg %p764
      $region58: #{tpu_custom_call.1} parent=5 // pred_check_branch
        %767 = sbr.rel (%p765) target = $region60
      $region59: #{tpu_custom_call.1} parent=5 // pred_region
        %s768 = ssub.s32 %s15, 2
        // Predicated region
        $region61: #{tpu_custom_call.1} parent=59 // pred_check
          %p769 = pneg %p194
        $region62: #{tpu_custom_call.1} parent=59 // pred_check_branch
          %771 = sbr.rel (%p769) target = $region64
        $region63: #{tpu_custom_call.1} parent=59 // pred_region
          %s772 = sand.u32 %s179, 1
          %s773 = scalar_lea.sflag [#allocation4], %s772
          %s774 = sand.u32 %s179, 1
          %s775 = smul.addr %s774, 16
          %s776 = scalar_lea.vmem [#allocation3], %s775
          %777 = dma.done %s773, 256
        $region64: #{tpu_custom_call.1} parent=59 // pred_fallthru
          _
      $region60: #{tpu_custom_call.1} parent=5 // pred_fallthru
        _
    $region6: #{tpu_custom_call.1} parent=1 // loop_footer
      %s19 = sadd.s32 1, %s15
    $region7: #{tpu_custom_call.1} parent=1 // loop_footer_branch
      %14 = sbr.rel target = $region3
    $region8: #{tpu_custom_call.1} parent=1 // loop_exit
      _
    %778 = vsyncpa [#allocation4], 1
    %s779 = scalar_lea.sflag [#allocation4], 1
    %780 = vsyncpa %s779, 1

</llo_original>
